<compile_context>
chip_gen: v7x
topology: tpu7x:2x2x1
jax: 0.10.0
libtpu: 0.0.40
codegen_flags: <defaults>
</compile_context>

<pallas_src>
import functools

import jax
import jax.numpy as jnp
import numpy as np
from jax import lax
from jax.experimental import pallas as pl
from jax.experimental.pallas import tpu as pltpu


def lstm_fc_kernel(x_ref, w_ih_ref, w_hh_ref, b_ref, fc_w_ref, fc_b_ref,
                   out_ref, gx_ref, h_ref, c_ref, *, Bs, Tc, H):
    """One (batch-shard, time-chunk) grid step of LSTM forward + final FC.

    x_ref    : (Tc*Bs, E)   time-major embedded chunk (row = t_local*Bs + b)
    w_ih_ref : (E, 4H)      pre-transposed weight_ih_l0 (gate order i, f, g, o)
    w_hh_ref : (H, 4H)      pre-transposed weight_hh_l0
    b_ref    : (1, 4H)      bias_ih_l0 + bias_hh_l0 (folded once)
    fc_w_ref : (H, C)       pre-transposed final Linear weight
    fc_b_ref : (1, C)       final Linear bias
    out_ref  : (Bs, C)      logits for this batch shard
    gx_ref   : (Tc*Bs, 4H)  VMEM scratch: hoisted input projection of the chunk
    h_ref/c_ref : (Bs, H)   persistent LSTM state carried across time chunks
    """
    t_chunk = pl.program_id(1)

    # ---- Init the carried state on the first time chunk of this shard.
    @pl.when(t_chunk == 0)
    def _():
        h_ref[...] = jnp.zeros_like(h_ref)
        c_ref[...] = jnp.zeros_like(c_ref)

    # ---- Phase 1: input projection for the whole chunk in one MXU matmul,
    #      combined bias folded in once.
    gx_ref[...] = (
        jnp.dot(x_ref[...], w_ih_ref[...], preferred_element_type=jnp.float32)
        + b_ref[...])

    # Hoist the recurrent weight load out of the time loop.
    w_hh = w_hh_ref[...]

    # ---- Phase 2: sequential recurrence over the chunk; only h @ W_hh
    #      remains per step.  Unroll is bounded by Tc (<= 8).
    def step(t, carry):
        h, c = carry
        row = pl.multiple_of(t * Bs, Bs)
        gates = gx_ref[pl.ds(row, Bs), :] + jnp.dot(
            h.astype(w_hh.dtype), w_hh, preferred_element_type=jnp.float32)
        # 2 full-vreg transcendental passes instead of 4 sub-vreg ones.
        sg = jax.nn.sigmoid(gates)
        tg = jnp.tanh(gates)
        i_g = sg[:, 0 * H:1 * H]
        f_g = sg[:, 1 * H:2 * H]
        g_g = tg[:, 2 * H:3 * H]
        o_g = sg[:, 3 * H:4 * H]
        c_new = f_g * c + i_g * g_g
        h_new = o_g * jnp.tanh(c_new)
        return h_new, c_new

    h_last, c_last = lax.fori_loop(0, Tc, step, (h_ref[...], c_ref[...]),
                                   unroll=True)
    h_ref[...] = h_last
    c_ref[...] = c_last

    # ---- Phase 3: final Linear on the last hidden state (last chunk only).
    @pl.when(t_chunk == pl.num_programs(1) - 1)
    def _():
        out_ref[...] = (
            jnp.dot(h_last, fc_w_ref[...], preferred_element_type=jnp.float32)
            + fc_b_ref[...])


def _largest_divisor_leq(n, cap):
    for d in range(min(n, cap), 0, -1):
        if n % d == 0:
            return d
    return 1


def rnn_model_forward(tokens, params, *, time_chunk=None,
                      mxu_dtype=jnp.float32):
    """tokens: int32 (B, T).  Returns logits (B, num_classes) float32."""
    B, T = tokens.shape
    E = params["embedding"].shape[1]
    H = params["w_hh"].shape[1]
    C = params["fc_w"].shape[0]

    # v7x has 2 TensorCores/chip: shard the batch over a leading "parallel"
    # grid axis whenever each shard still fills f32 sublanes (Bs >= 8).
    n_shards = 2 if (B % 16 == 0) else 1
    Bs = B // n_shards

    if time_chunk is None:
        time_chunk = _largest_divisor_leq(T, 8)
    Tc = time_chunk
    assert T % Tc == 0, "time_chunk must divide T"
    n_chunks = T // Tc

    # TODO(synk): the nn.Embedding gather (data-dependent table lookup) stays in
    # XLA; fusing it via scalar-prefetched token ids + a manual DMA gather would
    # remove one HBM round-trip of the activation tensor.
    x = params["embedding"][tokens.T]                        # (T, B, E) time-major
    x = x.reshape(T, n_shards, Bs, E).transpose(1, 0, 2, 3)  # (S, T, Bs, E)
    x = x.reshape(n_shards, T * Bs, E).astype(mxu_dtype)

    # One-time weight prep: pre-transpose, fold biases, optional bf16 MXU ops.
    w_ih_t = params["w_ih"].T.astype(mxu_dtype)              # (E, 4H)
    w_hh_t = params["w_hh"].T.astype(mxu_dtype)              # (H, 4H)
    fc_w_t = params["fc_w"].T.astype(jnp.float32)            # (H, C)
    b = (params["b_ih"] + params["b_hh"]).reshape(1, 4 * H).astype(jnp.float32)
    fc_b = params["fc_b"].reshape(1, C).astype(jnp.float32)

    # VMEM budget: derive from the actual chip (v7x TC has only 64 MiB
    # physical), leaving headroom for double-buffered input chunks.
    try:
        vmem_cap = pltpu.get_tpu_info().vmem_capacity_bytes
        vmem_limit = min(int(vmem_cap) * 3 // 4, 100 * 1024 * 1024)
    except Exception:
        vmem_limit = 48 * 1024 * 1024

    kernel = functools.partial(lstm_fc_kernel, Bs=Bs, Tc=Tc, H=H)
    out = pl.pallas_call(
        kernel,
        out_shape=jax.ShapeDtypeStruct((n_shards, Bs, C), jnp.float32),
        grid_spec=pltpu.PrefetchScalarGridSpec(
            num_scalar_prefetch=0,
            grid=(n_shards, n_chunks),
            in_specs=[
                # Time-chunked activations: double-buffered DMA per grid step.
                pl.BlockSpec((None, Tc * Bs, E), lambda s, t: (s, t, 0)),
                # Weights / biases: constant block index -> fetched once,
                # resident across the whole grid.
                pl.BlockSpec((E, 4 * H), lambda s, t: (0, 0)),
                pl.BlockSpec((H, 4 * H), lambda s, t: (0, 0)),
                pl.BlockSpec((1, 4 * H), lambda s, t: (0, 0)),
                pl.BlockSpec((H, C), lambda s, t: (0, 0)),
                pl.BlockSpec((1, C), lambda s, t: (0, 0)),
            ],
            out_specs=pl.BlockSpec((None, Bs, C), lambda s, t: (s, 0, 0)),
            scratch_shapes=[
                pltpu.VMEM((Tc * Bs, 4 * H), jnp.float32),   # gx chunk
                pltpu.VMEM((Bs, H), jnp.float32),            # h state
                pltpu.VMEM((Bs, H), jnp.float32),            # c state
            ]),
        compiler_params=pltpu.CompilerParams(
            dimension_semantics=("parallel", "arbitrary"),
            vmem_limit_bytes=vmem_limit),
    )(x, w_ih_t, w_hh_t, b, fc_w_t, fc_b)
    return out.reshape(B, C)


def reference_forward(tokens, params):
    """Pure-JAX reference (mirrors torch.nn.LSTM, batch_first, 1 layer, unidir)."""
    emb = params["embedding"][tokens]                # (B, T, E)
    B, T, E = emb.shape
    H = params["w_hh"].shape[1]
    b = params["b_ih"] + params["b_hh"]

    def step(carry, x_t):
        h, c = carry
        gates = x_t @ params["w_ih"].T + h @ params["w_hh"].T + b
        i = jax.nn.sigmoid(gates[:, 0 * H:1 * H])
        f = jax.nn.sigmoid(gates[:, 1 * H:2 * H])
        g = jnp.tanh(gates[:, 2 * H:3 * H])
        o = jax.nn.sigmoid(gates[:, 3 * H:4 * H])
        c = f * c + i * g
        h = o * jnp.tanh(c)
        return (h, c), None

    h0 = jnp.zeros((B, H), jnp.float32)
    (h, _), _ = jax.lax.scan(step, (h0, h0), jnp.transpose(emb, (1, 0, 2)))
    return h @ params["fc_w"].T + params["fc_b"]


def init_params(key, vocab_size, embedding_dim, hidden_dim, num_classes):
    ks = jax.random.split(key, 7)
    s = 1.0 / np.sqrt(hidden_dim)
    return {
        "embedding": jax.random.normal(ks[0], (vocab_size, embedding_dim),
                                       jnp.float32),
        "w_ih": jax.random.uniform(ks[1], (4 * hidden_dim, embedding_dim),
                                   jnp.float32, -s, s),
        "w_hh": jax.random.uniform(ks[2], (4 * hidden_dim, hidden_dim),
                                   jnp.float32, -s, s),
        "b_ih": jax.random.uniform(ks[3], (4 * hidden_dim,), jnp.float32, -s, s),
        "b_hh": jax.random.uniform(ks[4], (4 * hidden_dim,), jnp.float32, -s, s),
        "fc_w": jax.random.uniform(ks[5], (num_classes, hidden_dim),
                                   jnp.float32, -s, s),
        "fc_b": jax.random.uniform(ks[6], (num_classes,), jnp.float32, -s, s),
    }


if __name__ == "__main__":
    VOCAB, EMB, HID, CLS = 50, 32, 32, 8
    BATCH, SEQ = 8, 8          # batch >= 8 keeps f32 sublanes full

    key = jax.random.PRNGKey(0)
    k_par, k_tok = jax.random.split(key)
    params = init_params(k_par, VOCAB, EMB, HID, CLS)
    tokens = jax.random.randint(k_tok, (BATCH, SEQ), 0, VOCAB, dtype=jnp.int32)

    # time_chunk=4 -> grid of 2 time chunks, exercising the chunked/pipelined path.
    out = jax.block_until_ready(
        rnn_model_forward(tokens, params, time_chunk=4))
    ref = jax.block_until_ready(reference_forward(tokens, params))

    assert out.shape == (BATCH, CLS)
    np.testing.assert_allclose(np.asarray(out), np.asarray(ref),
                               rtol=2e-3, atol=2e-3)
    print("KERNEL_OK")
</pallas_src>

<mosaic_0001>
module attributes {stable_mosaic.version = 11 : i64} {
  func.func @lstm_fc_kernel(%arg0: i32, %arg1: i32, %arg2: memref<1x32x32xf32, #tpu.memory_space<vmem>>, %arg3: memref<32x128xf32, #tpu.memory_space<vmem>>, %arg4: memref<32x128xf32, #tpu.memory_space<vmem>>, %arg5: memref<1x128xf32, #tpu.memory_space<vmem>>, %arg6: memref<32x8xf32, #tpu.memory_space<vmem>>, %arg7: memref<1x8xf32, #tpu.memory_space<vmem>>, %arg8: memref<1x8x8xf32, #tpu.memory_space<vmem>>, %arg9: memref<32x128xf32, #tpu.memory_space<vmem>>, %arg10: memref<8x32xf32, #tpu.memory_space<vmem>>, %arg11: memref<8x32xf32, #tpu.memory_space<vmem>>) attributes {dimension_semantics = [#tpu.dimension_semantics<parallel>, #tpu.dimension_semantics<arbitrary>], iteration_bounds = array<i64: 1, 2>, scalar_prefetch = 0 : i64, scratch_operands = 3 : i64, tpu.core_type = #tpu.core_type<tc>, window_params = [{transform_indices = @transform_0, window_bounds = array<i64: 1, 32, 32>}, {pipeline_mode = #tpu.pipeline_mode<synchronous>, transform_indices = @transform_1, window_bounds = array<i64: 32, 128>}, {pipeline_mode = #tpu.pipeline_mode<synchronous>, transform_indices = @transform_2, window_bounds = array<i64: 32, 128>}, {pipeline_mode = #tpu.pipeline_mode<synchronous>, transform_indices = @transform_3, window_bounds = array<i64: 1, 128>}, {pipeline_mode = #tpu.pipeline_mode<synchronous>, transform_indices = @transform_4, window_bounds = array<i64: 32, 8>}, {pipeline_mode = #tpu.pipeline_mode<synchronous>, transform_indices = @transform_5, window_bounds = array<i64: 1, 8>}, {transform_indices = @transform_6, window_bounds = array<i64: 1, 8, 8>}]} {
    %c0_i32 = arith.constant 0 : i32
    %0 = arith.cmpi eq, %arg1, %c0_i32 : i32
    %1 = arith.extui %0 : i1 to i32
    %c0_i32_0 = arith.constant 0 : i32
    %2 = arith.cmpi ne, %1, %c0_i32_0 : i32
    scf.if %2 {
      %cst_37 = arith.constant 0.000000e+00 : f32
      %103 = vector.broadcast %cst_37 : f32 to vector<8x32xf32>
      %c0_38 = arith.constant 0 : index
      %c0_39 = arith.constant 0 : index
      %104 = vector.load %arg10[%c0_38, %c0_39] : memref<8x32xf32, #tpu.memory_space<vmem>>, vector<8x32xf32>
      tpu.vector_store %arg10[%c0_38, %c0_39], %103 {strides = array<i32>} : memref<8x32xf32, #tpu.memory_space<vmem>>, vector<8x32xf32>,
      %cst_40 = arith.constant 0.000000e+00 : f32
      %105 = vector.broadcast %cst_40 : f32 to vector<8x32xf32>
      %c0_41 = arith.constant 0 : index
      %c0_42 = arith.constant 0 : index
      %106 = vector.load %arg11[%c0_41, %c0_42] : memref<8x32xf32, #tpu.memory_space<vmem>>, vector<8x32xf32>
      tpu.vector_store %arg11[%c0_41, %c0_42], %105 {strides = array<i32>} : memref<8x32xf32, #tpu.memory_space<vmem>>, vector<8x32xf32>,
    } else {
    }
    %c0 = arith.constant 0 : index
    %c0_1 = arith.constant 0 : index
    %c0_2 = arith.constant 0 : index
    %3 = vector.load %arg2[%c0, %c0_1, %c0_2] : memref<1x32x32xf32, #tpu.memory_space<vmem>>, vector<1x32x32xf32>
    %4 = vector.shape_cast %3 : vector<1x32x32xf32> to vector<32x32xf32>
    %c0_3 = arith.constant 0 : index
    %c0_4 = arith.constant 0 : index
    %5 = vector.load %arg3[%c0_3, %c0_4] : memref<32x128xf32, #tpu.memory_space<vmem>>, vector<32x128xf32>
    %cst = arith.constant dense<0.000000e+00> : vector<32x128xf32>
    %6 = tpu.matmul %4, %5, %cst {dimension_numbers = #tpu.dot_dimension_numbers<[1], [0], [0], [1], [0, 0, 1, 1], [], []>} : vector<32x32xf32>, vector<32x128xf32>, vector<32x128xf32> -> vector<32x128xf32>
    %c0_5 = arith.constant 0 : index
    %c0_6 = arith.constant 0 : index
    %7 = vector.load %arg5[%c0_5, %c0_6] : memref<1x128xf32, #tpu.memory_space<vmem>>, vector<1x128xf32>
    %8 = vector.broadcast %7 : vector<1x128xf32> to vector<32x128xf32>
    %9 = arith.addf %6, %8 : vector<32x128xf32>
    %c0_7 = arith.constant 0 : index
    %c0_8 = arith.constant 0 : index
    %10 = vector.load %arg9[%c0_7, %c0_8] : memref<32x128xf32, #tpu.memory_space<vmem>>, vector<32x128xf32>
    tpu.vector_store %arg9[%c0_7, %c0_8], %9 {strides = array<i32>} : memref<32x128xf32, #tpu.memory_space<vmem>>, vector<32x128xf32>,
    %c0_9 = arith.constant 0 : index
    %c0_10 = arith.constant 0 : index
    %11 = vector.load %arg4[%c0_9, %c0_10] : memref<32x128xf32, #tpu.memory_space<vmem>>, vector<32x128xf32>
    %c0_11 = arith.constant 0 : index
    %c0_12 = arith.constant 0 : index
    %12 = vector.load %arg10[%c0_11, %c0_12] : memref<8x32xf32, #tpu.memory_space<vmem>>, vector<8x32xf32>
    %c0_13 = arith.constant 0 : index
    %c0_14 = arith.constant 0 : index
    %13 = vector.load %arg11[%c0_13, %c0_14] : memref<8x32xf32, #tpu.memory_space<vmem>>, vector<8x32xf32>
    %c0_i32_15 = arith.constant 0 : i32
    %c8_i32 = arith.constant 8 : i32
    %14 = arith.muli %c0_i32_15, %c8_i32 : i32
    %15 = tpu.assume_multiple %14, 8 : i32
    %16 = arith.index_cast %15 : i32 to index
    %c0_16 = arith.constant 0 : index
    %17 = vector.load %arg9[%16, %c0_16] : memref<32x128xf32, #tpu.memory_space<vmem>>, vector<8x128xf32>
    %cst_17 = arith.constant dense<0.000000e+00> : vector<8x128xf32>
    %18 = tpu.matmul %12, %11, %cst_17 {dimension_numbers = #tpu.dot_dimension_numbers<[1], [0], [0], [1], [0, 0, 1, 1], [], []>} : vector<8x32xf32>, vector<32x128xf32>, vector<8x128xf32> -> vector<8x128xf32>
    %19 = arith.addf %17, %18 : vector<8x128xf32>
    %20 = arith.negf %19 : vector<8x128xf32>
    %21 = math.exp %20 : vector<8x128xf32>
    %cst_18 = arith.constant 1.000000e+00 : f32
    %22 = vector.broadcast %cst_18 : f32 to vector<8x128xf32>
    %23 = arith.addf %22, %21 : vector<8x128xf32>
    %24 = arith.divf %22, %23 : vector<8x128xf32>
    %25 = math.tanh %19 : vector<8x128xf32>
    %26 = vector.extract_strided_slice %24 {offsets = [0, 0], sizes = [8, 32], strides = [1, 1]} : vector<8x128xf32> to vector<8x32xf32>
    %27 = vector.extract_strided_slice %24 {offsets = [0, 32], sizes = [8, 32], strides = [1, 1]} : vector<8x128xf32> to vector<8x32xf32>
    %28 = vector.extract_strided_slice %25 {offsets = [0, 64], sizes = [8, 32], strides = [1, 1]} : vector<8x128xf32> to vector<8x32xf32>
    %29 = vector.extract_strided_slice %24 {offsets = [0, 96], sizes = [8, 32], strides = [1, 1]} : vector<8x128xf32> to vector<8x32xf32>
    %30 = arith.mulf %27, %13 : vector<8x32xf32>
    %31 = arith.mulf %26, %28 : vector<8x32xf32>
    %32 = arith.addf %30, %31 : vector<8x32xf32>
    %33 = math.tanh %32 : vector<8x32xf32>
    %34 = arith.mulf %29, %33 : vector<8x32xf32>
    %c1_i32 = arith.constant 1 : i32
    %c8_i32_19 = arith.constant 8 : i32
    %35 = arith.muli %c1_i32, %c8_i32_19 : i32
    %36 = tpu.assume_multiple %35, 8 : i32
    %37 = arith.index_cast %36 : i32 to index
    %c0_20 = arith.constant 0 : index
    %38 = vector.load %arg9[%37, %c0_20] : memref<32x128xf32, #tpu.memory_space<vmem>>, vector<8x128xf32>
    %cst_21 = arith.constant dense<0.000000e+00> : vector<8x128xf32>
    %39 = tpu.matmul %34, %11, %cst_21 {dimension_numbers = #tpu.dot_dimension_numbers<[1], [0], [0], [1], [0, 0, 1, 1], [], []>} : vector<8x32xf32>, vector<32x128xf32>, vector<8x128xf32> -> vector<8x128xf32>
    %40 = arith.addf %38, %39 : vector<8x128xf32>
    %41 = arith.negf %40 : vector<8x128xf32>
    %42 = math.exp %41 : vector<8x128xf32>
    %cst_22 = arith.constant 1.000000e+00 : f32
    %43 = vector.broadcast %cst_22 : f32 to vector<8x128xf32>
    %44 = arith.addf %43, %42 : vector<8x128xf32>
    %45 = arith.divf %43, %44 : vector<8x128xf32>
    %46 = math.tanh %40 : vector<8x128xf32>
    %47 = vector.extract_strided_slice %45 {offsets = [0, 0], sizes = [8, 32], strides = [1, 1]} : vector<8x128xf32> to vector<8x32xf32>
    %48 = vector.extract_strided_slice %45 {offsets = [0, 32], sizes = [8, 32], strides = [1, 1]} : vector<8x128xf32> to vector<8x32xf32>
    %49 = vector.extract_strided_slice %46 {offsets = [0, 64], sizes = [8, 32], strides = [1, 1]} : vector<8x128xf32> to vector<8x32xf32>
    %50 = vector.extract_strided_slice %45 {offsets = [0, 96], sizes = [8, 32], strides = [1, 1]} : vector<8x128xf32> to vector<8x32xf32>
    %51 = arith.mulf %48, %32 : vector<8x32xf32>
    %52 = arith.mulf %47, %49 : vector<8x32xf32>
    %53 = arith.addf %51, %52 : vector<8x32xf32>
    %54 = math.tanh %53 : vector<8x32xf32>
    %55 = arith.mulf %50, %54 : vector<8x32xf32>
    %c2_i32 = arith.constant 2 : i32
    %c8_i32_23 = arith.constant 8 : i32
    %56 = arith.muli %c2_i32, %c8_i32_23 : i32
    %57 = tpu.assume_multiple %56, 8 : i32
    %58 = arith.index_cast %57 : i32 to index
    %c0_24 = arith.constant 0 : index
    %59 = vector.load %arg9[%58, %c0_24] : memref<32x128xf32, #tpu.memory_space<vmem>>, vector<8x128xf32>
    %cst_25 = arith.constant dense<0.000000e+00> : vector<8x128xf32>
    %60 = tpu.matmul %55, %11, %cst_25 {dimension_numbers = #tpu.dot_dimension_numbers<[1], [0], [0], [1], [0, 0, 1, 1], [], []>} : vector<8x32xf32>, vector<32x128xf32>, vector<8x128xf32> -> vector<8x128xf32>
    %61 = arith.addf %59, %60 : vector<8x128xf32>
    %62 = arith.negf %61 : vector<8x128xf32>
    %63 = math.exp %62 : vector<8x128xf32>
    %cst_26 = arith.constant 1.000000e+00 : f32
    %64 = vector.broadcast %cst_26 : f32 to vector<8x128xf32>
    %65 = arith.addf %64, %63 : vector<8x128xf32>
    %66 = arith.divf %64, %65 : vector<8x128xf32>
    %67 = math.tanh %61 : vector<8x128xf32>
    %68 = vector.extract_strided_slice %66 {offsets = [0, 0], sizes = [8, 32], strides = [1, 1]} : vector<8x128xf32> to vector<8x32xf32>
    %69 = vector.extract_strided_slice %66 {offsets = [0, 32], sizes = [8, 32], strides = [1, 1]} : vector<8x128xf32> to vector<8x32xf32>
    %70 = vector.extract_strided_slice %67 {offsets = [0, 64], sizes = [8, 32], strides = [1, 1]} : vector<8x128xf32> to vector<8x32xf32>
    %71 = vector.extract_strided_slice %66 {offsets = [0, 96], sizes = [8, 32], strides = [1, 1]} : vector<8x128xf32> to vector<8x32xf32>
    %72 = arith.mulf %69, %53 : vector<8x32xf32>
    %73 = arith.mulf %68, %70 : vector<8x32xf32>
    %74 = arith.addf %72, %73 : vector<8x32xf32>
    %75 = math.tanh %74 : vector<8x32xf32>
    %76 = arith.mulf %71, %75 : vector<8x32xf32>
    %c3_i32 = arith.constant 3 : i32
    %c8_i32_27 = arith.constant 8 : i32
    %77 = arith.muli %c3_i32, %c8_i32_27 : i32
    %78 = tpu.assume_multiple %77, 8 : i32
    %79 = arith.index_cast %78 : i32 to index
    %c0_28 = arith.constant 0 : index
    %80 = vector.load %arg9[%79, %c0_28] : memref<32x128xf32, #tpu.memory_space<vmem>>, vector<8x128xf32>
    %cst_29 = arith.constant dense<0.000000e+00> : vector<8x128xf32>
    %81 = tpu.matmul %76, %11, %cst_29 {dimension_numbers = #tpu.dot_dimension_numbers<[1], [0], [0], [1], [0, 0, 1, 1], [], []>} : vector<8x32xf32>, vector<32x128xf32>, vector<8x128xf32> -> vector<8x128xf32>
    %82 = arith.addf %80, %81 : vector<8x128xf32>
    %83 = arith.negf %82 : vector<8x128xf32>
    %84 = math.exp %83 : vector<8x128xf32>
    %cst_30 = arith.constant 1.000000e+00 : f32
    %85 = vector.broadcast %cst_30 : f32 to vector<8x128xf32>
    %86 = arith.addf %85, %84 : vector<8x128xf32>
    %87 = arith.divf %85, %86 : vector<8x128xf32>
    %88 = math.tanh %82 : vector<8x128xf32>
    %89 = vector.extract_strided_slice %87 {offsets = [0, 0], sizes = [8, 32], strides = [1, 1]} : vector<8x128xf32> to vector<8x32xf32>
    %90 = vector.extract_strided_slice %87 {offsets = [0, 32], sizes = [8, 32], strides = [1, 1]} : vector<8x128xf32> to vector<8x32xf32>
    %91 = vector.extract_strided_slice %88 {offsets = [0, 64], sizes = [8, 32], strides = [1, 1]} : vector<8x128xf32> to vector<8x32xf32>
    %92 = vector.extract_strided_slice %87 {offsets = [0, 96], sizes = [8, 32], strides = [1, 1]} : vector<8x128xf32> to vector<8x32xf32>
    %93 = arith.mulf %90, %74 : vector<8x32xf32>
    %94 = arith.mulf %89, %91 : vector<8x32xf32>
    %95 = arith.addf %93, %94 : vector<8x32xf32>
    %96 = math.tanh %95 : vector<8x32xf32>
    %97 = arith.mulf %92, %96 : vector<8x32xf32>
    %c4_i32 = arith.constant 4 : i32
    %c0_31 = arith.constant 0 : index
    %c0_32 = arith.constant 0 : index
    %98 = vector.load %arg10[%c0_31, %c0_32] : memref<8x32xf32, #tpu.memory_space<vmem>>, vector<8x32xf32>
    tpu.vector_store %arg10[%c0_31, %c0_32], %97 {strides = array<i32>} : memref<8x32xf32, #tpu.memory_space<vmem>>, vector<8x32xf32>,
    %c0_33 = arith.constant 0 : index
    %c0_34 = arith.constant 0 : index
    %99 = vector.load %arg11[%c0_33, %c0_34] : memref<8x32xf32, #tpu.memory_space<vmem>>, vector<8x32xf32>
    tpu.vector_store %arg11[%c0_33, %c0_34], %95 {strides = array<i32>} : memref<8x32xf32, #tpu.memory_space<vmem>>, vector<8x32xf32>,
    %c1_i32_35 = arith.constant 1 : i32
    %100 = arith.cmpi eq, %arg1, %c1_i32_35 : i32
    %101 = arith.extui %100 : i1 to i32
    %c0_i32_36 = arith.constant 0 : i32
    %102 = arith.cmpi ne, %101, %c0_i32_36 : i32
    scf.if %102 {
      %c0_37 = arith.constant 0 : index
      %c0_38 = arith.constant 0 : index
      %103 = vector.load %arg6[%c0_37, %c0_38] : memref<32x8xf32, #tpu.memory_space<vmem>>, vector<32x8xf32>
      %cst_39 = arith.constant dense<0.000000e+00> : vector<8x8xf32>
      %104 = tpu.matmul %97, %103, %cst_39 {dimension_numbers = #tpu.dot_dimension_numbers<[1], [0], [0], [1], [0, 0, 1, 1], [], []>} : vector<8x32xf32>, vector<32x8xf32>, vector<8x8xf32> -> vector<8x8xf32>
      %c0_40 = arith.constant 0 : index
      %c0_41 = arith.constant 0 : index
      %105 = vector.load %arg7[%c0_40, %c0_41] : memref<1x8xf32, #tpu.memory_space<vmem>>, vector<1x8xf32>
      %106 = vector.broadcast %105 : vector<1x8xf32> to vector<8x8xf32>
      %107 = arith.addf %104, %106 : vector<8x8xf32>
      %c0_42 = arith.constant 0 : index
      %c0_43 = arith.constant 0 : index
      %c0_44 = arith.constant 0 : index
      %108 = vector.load %arg8[%c0_42, %c0_43, %c0_44] : memref<1x8x8xf32, #tpu.memory_space<vmem>>, vector<1x8x8xf32>
      %109 = vector.shape_cast %108 : vector<1x8x8xf32> to vector<8x8xf32>
      %110 = vector.shape_cast %107 : vector<8x8xf32> to vector<1x8x8xf32>
      tpu.vector_store %arg8[%c0_42, %c0_43, %c0_44], %110 {strides = array<i32>} : memref<1x8x8xf32, #tpu.memory_space<vmem>>, vector<1x8x8xf32>,
    } else {
    }
    return
  }
  func.func @transform_0(%arg0: i32, %arg1: i32) -> (i32, i32, i32) {
    %c0_i32 = arith.constant 0 : i32
    %c0_i32_0 = arith.constant 0 : i32
    return %arg0, %arg1, %c0_i32 : i32, i32, i32
  }
  func.func @transform_1(%arg0: i32, %arg1: i32) -> (i32, i32) {
    %c0_i32 = arith.constant 0 : i32
    %c0_i32_0 = arith.constant 0 : i32
    %c0_i32_1 = arith.constant 0 : i32
    return %c0_i32, %c0_i32_0 : i32, i32
  }
  func.func @transform_2(%arg0: i32, %arg1: i32) -> (i32, i32) {
    %c0_i32 = arith.constant 0 : i32
    %c0_i32_0 = arith.constant 0 : i32
    %c0_i32_1 = arith.constant 0 : i32
    return %c0_i32, %c0_i32_0 : i32, i32
  }
  func.func @transform_3(%arg0: i32, %arg1: i32) -> (i32, i32) {
    %c0_i32 = arith.constant 0 : i32
    %c0_i32_0 = arith.constant 0 : i32
    %c0_i32_1 = arith.constant 0 : i32
    return %c0_i32, %c0_i32_0 : i32, i32
  }
  func.func @transform_4(%arg0: i32, %arg1: i32) -> (i32, i32) {
    %c0_i32 = arith.constant 0 : i32
    %c0_i32_0 = arith.constant 0 : i32
    %c0_i32_1 = arith.constant 0 : i32
    return %c0_i32, %c0_i32_0 : i32, i32
  }
  func.func @transform_5(%arg0: i32, %arg1: i32) -> (i32, i32) {
    %c0_i32 = arith.constant 0 : i32
    %c0_i32_0 = arith.constant 0 : i32
    %c0_i32_1 = arith.constant 0 : i32
    return %c0_i32, %c0_i32_0 : i32, i32
  }
  func.func @transform_6(%arg0: i32, %arg1: i32) -> (i32, i32, i32) {
    %c0_i32 = arith.constant 0 : i32
    %c0_i32_0 = arith.constant 0 : i32
    %c0_i32_1 = arith.constant 0 : i32
    return %arg0, %c0_i32, %c0_i32_0 : i32, i32, i32
  }
}

</mosaic_0001>

<llo_original>
// kernel: tpu_custom_call.1
$region0: #{tpu_custom_call.1}
  #allocation0 [shape = 'u32[]', space=smem, size = 0x4, offset = 0x4, fixed_abs, tag = 'smem constant byte address 0x4 - core index']
  #allocation1 [shape = 'u32[144,128]{1,0:T(1,128)}', space=vmem, size = 0x12000, scoped, tag = 'internal scratch']
  #allocation2 [shape = 'f32[32,128]{1,0:T(8,128)}', space=vmem, size = 0x4000, scoped, tag = 'scratch operand']
  #allocation3 [shape = 'f32[8,32]{1,0:T(8,128)}', space=vmem, size = 0x1000, scoped, tag = 'scratch operand']
  #allocation4 [shape = 'f32[8,32]{1,0:T(8,128)}', space=vmem, size = 0x1000, scoped, tag = 'scratch operand']
  %s0 = inlined_call_operand.vmem [shape: f32[1,64,32], index: 0, kind: input, shape index: {}]
  %s1 = inlined_call_operand.vmem [shape: f32[32,128], index: 1, kind: input, shape index: {}]
  %s2 = inlined_call_operand.vmem [shape: f32[32,128], index: 2, kind: input, shape index: {}]
  %s3 = inlined_call_operand.vmem [shape: f32[1,128], index: 3, kind: input, shape index: {}]
  %s4 = inlined_call_operand.vmem [shape: f32[32,8], index: 4, kind: input, shape index: {}]
  %s5 = inlined_call_operand.vmem [shape: f32[1,8], index: 5, kind: input, shape index: {}]
  %s6 = inlined_call_operand.hbm [shape: f32[1,8,8], index: 6, kind: output, shape index: {}]
  %s7 = sld [smem:[#allocation0]]
  $region65: #{tpu_custom_call.1} parent=0
    _
  %s9 = ssub.s32 1, %s7
  %s10 = scalar_select 0, %s9, %s7
  $region1: #{tpu_custom_call.1} parent=0
    #allocation5 [shape = 'u8[4096]{0}', space=vmem, size = 0x1000, scoped, tag = 'output window, operand 0, single buffered']
    #allocation6 [shape = 's32[2]{0}', space=sflag, size = 0x8, scoped, tag = 'scoped memory for tpu_custom_call.1']
    %11 = vsyncpa [#allocation6], 0
    loop: start=0, step=1, limit=4
    $region2: #{tpu_custom_call.1} parent=1 // loop_pre_header
      _
    $region3: #{tpu_custom_call.1} parent=1 // loop_header
      %s13 = sphi 0, %s17
      %p14 = scmp.ge.s32.totalorder %s13, 4
      %s20 = sphi 0, %s32
      %s21 = sphi 0, %s28
      %s22 = sphi 0, %s20
      %s23 = sphi 0, %s21
      %s24 = sphi 0, %s22
      %s25 = sphi 0, %s23
      %s37 = sphi 0, %s39
      %s40 = sphi 0, %s37
      %s41 = sphi 0, %s40
      %s57 = sphi 0, %s41
      %s61 = sphi 0, %s61
      %s63 = sphi 0, %s61
      %s64 = sphi 0, %s63
      %s78 = sphi 0, %s64
      %s82 = sphi 0, %s82
      %s84 = sphi 0, %s82
      %s85 = sphi 0, %s84
      %s99 = sphi 0, %s85
      %s103 = sphi 0, %s103
      %s105 = sphi 0, %s103
      %s106 = sphi 0, %s105
      %s120 = sphi 0, %s106
      %s124 = sphi 0, %s124
      %s126 = sphi 0, %s124
      %s127 = sphi 0, %s126
      %s141 = sphi 0, %s127
      %s145 = sphi 0, %s145
      %s147 = sphi 0, %s145
      %s148 = sphi 0, %s147
      %s162 = sphi 0, %s148
      %s168 = sphi 0, %s170
      %s171 = sphi 0, %s168
      %s172 = sphi 0, %s171
      %s188 = sphi 0, %s172
    $region4: #{tpu_custom_call.1} parent=1 // loop_header_branch
      %16 = sbr.rel (%p14) target = $region8
    $region5: #{tpu_custom_call.1} parent=1 // loop_body
      %s18 = ssub.s32 %s13, 1
      %s19 = ssub.s32 %s13, 2
      %s26 = sadd.s32 1, %s21
      %p27 = scmp.ge.s32.totalorder %s26, 2
      %s28 = scalar_select %p27, 0, %s26
      %s29 = sadd.s32 1, %s20
      %s30 = scalar_select %p27, %s29, %s20
      %p31 = scmp.ge.s32.totalorder %s30, 1
      %s32 = scalar_select %p31, 0, %s30
      %s33 = ssub.s32 %s20, %s32
      %s34 = ssub.s32 %s21, %s28
      %s35 = sor.u32 %s33, %s34
      %p36 = scmp.eq.s32.totalorder %s35, 0
      %s38 = sadd.s32 %s37, 1
      %s39 = scalar_select %p36, %s37, %s38
      %p42 = pneg %p36
      %p43 = scmp.eq.s32.totalorder %s13, 1
      %p44 = por %p42, %p43
      %p45 = scmp.ne.s32.totalorder %s37, %s40
      %p46 = scmp.eq.s32.totalorder %s13, 0
      %p47 = por %p45, %p46
      %p48 = scmp.ne.s32.totalorder %s37, %s40
      %p49 = scmp.eq.s32.totalorder %s18, 1
      %p50 = por %p48, %p49
      %p51 = scmp.ne.s32.totalorder %s40, %s41
      %p52 = scmp.eq.s32.totalorder %s18, 0
      %p53 = por %p51, %p52
      %p54 = scmp.ne.s32.totalorder %s40, %s41
      %p55 = scmp.eq.s32.totalorder %s19, 1
      %p56 = por %p54, %p55
      %p58 = scmp.ne.s32.totalorder %s41, %s57
      %p59 = scmp.eq.s32.totalorder %s19, 0
      %p60 = por %p58, %p59
      %s62 = sadd.s32 %s61, 1
      %p65 = scmp.eq.s32.totalorder %s13, 1
      %p66 = scmp.ne.s32.totalorder %s61, %s63
      %p67 = scmp.eq.s32.totalorder %s13, 0
      %p68 = por %p66, %p67
      %p69 = scmp.ne.s32.totalorder %s61, %s63
      %p70 = scmp.eq.s32.totalorder %s18, 1
      %p71 = por %p69, %p70
      %p72 = scmp.ne.s32.totalorder %s63, %s64
      %p73 = scmp.eq.s32.totalorder %s18, 0
      %p74 = por %p72, %p73
      %p75 = scmp.ne.s32.totalorder %s63, %s64
      %p76 = scmp.eq.s32.totalorder %s19, 1
      %p77 = por %p75, %p76
      %p79 = scmp.ne.s32.totalorder %s64, %s78
      %p80 = scmp.eq.s32.totalorder %s19, 0
      %p81 = por %p79, %p80
      %s83 = sadd.s32 %s82, 1
      %p86 = scmp.eq.s32.totalorder %s13, 1
      %p87 = scmp.ne.s32.totalorder %s82, %s84
      %p88 = scmp.eq.s32.totalorder %s13, 0
      %p89 = por %p87, %p88
      %p90 = scmp.ne.s32.totalorder %s82, %s84
      %p91 = scmp.eq.s32.totalorder %s18, 1
      %p92 = por %p90, %p91
      %p93 = scmp.ne.s32.totalorder %s84, %s85
      %p94 = scmp.eq.s32.totalorder %s18, 0
      %p95 = por %p93, %p94
      %p96 = scmp.ne.s32.totalorder %s84, %s85
      %p97 = scmp.eq.s32.totalorder %s19, 1
      %p98 = por %p96, %p97
      %p100 = scmp.ne.s32.totalorder %s85, %s99
      %p101 = scmp.eq.s32.totalorder %s19, 0
      %p102 = por %p100, %p101
      %s104 = sadd.s32 %s103, 1
      %p107 = scmp.eq.s32.totalorder %s13, 1
      %p108 = scmp.ne.s32.totalorder %s103, %s105
      %p109 = scmp.eq.s32.totalorder %s13, 0
      %p110 = por %p108, %p109
      %p111 = scmp.ne.s32.totalorder %s103, %s105
      %p112 = scmp.eq.s32.totalorder %s18, 1
      %p113 = por %p111, %p112
      %p114 = scmp.ne.s32.totalorder %s105, %s106
      %p115 = scmp.eq.s32.totalorder %s18, 0
      %p116 = por %p114, %p115
      %p117 = scmp.ne.s32.totalorder %s105, %s106
      %p118 = scmp.eq.s32.totalorder %s19, 1
      %p119 = por %p117, %p118
      %p121 = scmp.ne.s32.totalorder %s106, %s120
      %p122 = scmp.eq.s32.totalorder %s19, 0
      %p123 = por %p121, %p122
      %s125 = sadd.s32 %s124, 1
      %p128 = scmp.eq.s32.totalorder %s13, 1
      %p129 = scmp.ne.s32.totalorder %s124, %s126
      %p130 = scmp.eq.s32.totalorder %s13, 0
      %p131 = por %p129, %p130
      %p132 = scmp.ne.s32.totalorder %s124, %s126
      %p133 = scmp.eq.s32.totalorder %s18, 1
      %p134 = por %p132, %p133
      %p135 = scmp.ne.s32.totalorder %s126, %s127
      %p136 = scmp.eq.s32.totalorder %s18, 0
      %p137 = por %p135, %p136
      %p138 = scmp.ne.s32.totalorder %s126, %s127
      %p139 = scmp.eq.s32.totalorder %s19, 1
      %p140 = por %p138, %p139
      %p142 = scmp.ne.s32.totalorder %s127, %s141
      %p143 = scmp.eq.s32.totalorder %s19, 0
      %p144 = por %p142, %p143
      %s146 = sadd.s32 %s145, 1
      %p149 = scmp.eq.s32.totalorder %s13, 1
      %p150 = scmp.ne.s32.totalorder %s145, %s147
      %p151 = scmp.eq.s32.totalorder %s13, 0
      %p152 = por %p150, %p151
      %p153 = scmp.ne.s32.totalorder %s145, %s147
      %p154 = scmp.eq.s32.totalorder %s18, 1
      %p155 = por %p153, %p154
      %p156 = scmp.ne.s32.totalorder %s147, %s148
      %p157 = scmp.eq.s32.totalorder %s18, 0
      %p158 = por %p156, %p157
      %p159 = scmp.ne.s32.totalorder %s147, %s148
      %p160 = scmp.eq.s32.totalorder %s19, 1
      %p161 = por %p159, %p160
      %p163 = scmp.ne.s32.totalorder %s148, %s162
      %p164 = scmp.eq.s32.totalorder %s19, 0
      %p165 = por %p163, %p164
      %s166 = ssub.s32 %s20, %s32
      %p167 = scmp.eq.s32.totalorder %s166, 0
      %s169 = sadd.s32 %s168, 1
      %s170 = scalar_select %p167, %s168, %s169
      %p173 = pneg %p167
      %p174 = scmp.eq.s32.totalorder %s13, 1
      %p175 = por %p173, %p174
      %p176 = scmp.ne.s32.totalorder %s168, %s171
      %p177 = scmp.eq.s32.totalorder %s13, 0
      %p178 = por %p176, %p177
      %p179 = scmp.ne.s32.totalorder %s168, %s171
      %p180 = scmp.eq.s32.totalorder %s18, 1
      %p181 = por %p179, %p180
      %p182 = scmp.ne.s32.totalorder %s171, %s172
      %p183 = scmp.eq.s32.totalorder %s18, 0
      %p184 = por %p182, %p183
      %p185 = scmp.ne.s32.totalorder %s171, %s172
      %p186 = scmp.eq.s32.totalorder %s19, 1
      %p187 = por %p185, %p186
      %p189 = scmp.ne.s32.totalorder %s172, %s188
      %p190 = scmp.eq.s32.totalorder %s19, 0
      %p191 = por %p189, %p190
      %p192 = scmp.le.s32.totalorder 1, %s13
      %p193 = scmp.lt.s32.totalorder %s13, 3
      %p194 = pnand %p192, %p193
      %p195 = pneg %p194
      // Predicated region
      $region9: #{tpu_custom_call.1} parent=5 // pred_check
        _
      $region10: #{tpu_custom_call.1} parent=5 // pred_check_branch
        %197 = sbr.rel (%p194) target = $region12
      $region11: #{tpu_custom_call.1} parent=5 // pred_region
        %s198 = ssub.s32 %s13, 1
        // Predicated region
        $region13: #{tpu_custom_call.1} parent=11 // pred_check
          %p199 = pneg %p74
        $region14: #{tpu_custom_call.1} parent=11 // pred_check_branch
          %201 = sbr.rel (%p199) target = $region16
        $region15: #{tpu_custom_call.1} parent=11 // pred_region
          _
        $region16: #{tpu_custom_call.1} parent=11 // pred_fallthru
          _
        // Predicated region
        $region17: #{tpu_custom_call.1} parent=11 // pred_check
          %p202 = pneg %p95
        $region18: #{tpu_custom_call.1} parent=11 // pred_check_branch
          %204 = sbr.rel (%p202) target = $region20
        $region19: #{tpu_custom_call.1} parent=11 // pred_region
          _
        $region20: #{tpu_custom_call.1} parent=11 // pred_fallthru
          _
        // Predicated region
        $region21: #{tpu_custom_call.1} parent=11 // pred_check
          %p205 = pneg %p116
        $region22: #{tpu_custom_call.1} parent=11 // pred_check_branch
          %207 = sbr.rel (%p205) target = $region24
        $region23: #{tpu_custom_call.1} parent=11 // pred_region
          _
        $region24: #{tpu_custom_call.1} parent=11 // pred_fallthru
          _
        // Predicated region
        $region25: #{tpu_custom_call.1} parent=11 // pred_check
          %p208 = pneg %p137
        $region26: #{tpu_custom_call.1} parent=11 // pred_check_branch
          %210 = sbr.rel (%p208) target = $region28
        $region27: #{tpu_custom_call.1} parent=11 // pred_region
          _
        $region28: #{tpu_custom_call.1} parent=11 // pred_fallthru
          _
        // Predicated region
        $region29: #{tpu_custom_call.1} parent=11 // pred_check
          %p211 = pneg %p158
        $region30: #{tpu_custom_call.1} parent=11 // pred_check_branch
          %213 = sbr.rel (%p211) target = $region32
        $region31: #{tpu_custom_call.1} parent=11 // pred_region
          _
        $region32: #{tpu_custom_call.1} parent=11 // pred_fallthru
          _
      $region12: #{tpu_custom_call.1} parent=5 // pred_fallthru
        _
      %p214 = scmp.lt.s32.totalorder %s13, 2
      // Predicated region
      $region33: #{tpu_custom_call.1} parent=5 // pred_check
        %p215 = pneg %p214
      $region34: #{tpu_custom_call.1} parent=5 // pred_check_branch
        %217 = sbr.rel (%p215) target = $region36
      $region35: #{tpu_custom_call.1} parent=5 // pred_region
        // Predicated region
        $region37: #{tpu_custom_call.1} parent=35 // pred_check
          %p218 = pneg %p47
        $region38: #{tpu_custom_call.1} parent=35 // pred_check_branch
          %220 = sbr.rel (%p218) target = $region40
        $region39: #{tpu_custom_call.1} parent=35 // pred_region
          %s221 = smul.u32 4, %s21
          %p222 = scmp.lt.s32.totalorder %s20, 0
          %s223 = scalar_select %p222, %s20, 0
          %p224 = scmp.lt.s32.totalorder %s221, 7
          %s225 = scalar_select %p224, %s221, 7
          %s226 = smul.addr %s223, 8
          %s227 = sadd.s32 %s225, %s226
          %s228 = smul.addr %s227, 8
          %s229 = scalar_lea.vmem %s0, %s228
          %s230 = smul.u32 4, %s21
        $region40: #{tpu_custom_call.1} parent=35 // pred_fallthru
          _
      $region36: #{tpu_custom_call.1} parent=5 // pred_fallthru
        _
      %p231 = scmp.le.s32.totalorder 1, %s13
      %p232 = scmp.lt.s32.totalorder %s13, 3
      %p233 = pnand %p231, %p232
      %p234 = pneg %p233
      // Predicated region
      $region41: #{tpu_custom_call.1} parent=5 // pred_check
        _
      $region42: #{tpu_custom_call.1} parent=5 // pred_check_branch
        %236 = sbr.rel (%p233) target = $region44
      $region43: #{tpu_custom_call.1} parent=5 // pred_region
        %s237 = ssub.s32 %s13, 1
        %s238 = smul.u32 4, %s23
        %p239 = scmp.lt.s32.totalorder %s22, 0
        %s240 = scalar_select %p239, %s22, 0
        %p241 = scmp.lt.s32.totalorder %s238, 7
        %s242 = scalar_select %p241, %s238, 7
        %s243 = smul.addr %s240, 8
        %s244 = sadd.s32 %s242, %s243
        %s245 = smul.addr %s244, 8
        %s246 = scalar_lea.vmem %s0, %s245
        %p247 = pneg %p53
        %p248 = pneg %p50
        %p249 = pneg %p74
        %p250 = pneg %p71
        %p251 = pneg %p95
        %p252 = pneg %p92
        %p253 = pneg %p116
        %p254 = pneg %p113
        %p255 = pneg %p137
        %p256 = pneg %p134
        %p257 = pneg %p158
        %p258 = pneg %p155
        %p259 = pneg %p184
        %p260 = pneg %p181
        %s261 = smul.u32 4, %s23
        %p262 = scmp.lt.s32.totalorder %s22, 0
        %s263 = scalar_select %p262, %s22, 0
        %p264 = scmp.lt.s32.totalorder %s261, 7
        %s265 = scalar_select %p264, %s261, 7
        %s266 = smul.addr %s263, 8
        %s267 = sadd.s32 %s265, %s266
        %s268 = smul.addr %s267, 8
        %s269 = scalar_lea.vmem %s0, %s268
        %s270 = smul.u32 4, %s23
        %p271 = scmp.eq.s32.totalorder %s23, 0
        // Predicated region
        $region45: #{tpu_custom_call.1} parent=43 // pred_check
          %p272 = pneg %p271
        $region46: #{tpu_custom_call.1} parent=43 // pred_check_branch
          %274 = sbr.rel (%p272) target = $region48
        $region47: #{tpu_custom_call.1} parent=43 // pred_region
          %vm275 = vcmask 261120
          %276 = vst.msk [vmem:[#allocation3] sm:$0xff] %vm275, 0.0
          %277 = vst.msk [vmem:[#allocation4] sm:$0xff] %vm275, 0.0
        $region48: #{tpu_custom_call.1} parent=43 // pred_fallthru
          _
        %v278 = vld [vmem:[%s269] sm:$0xff]
        %v279 = vld [vmem:[%s269 + $0x8] sm:$0xff]
        %v280 = vld [vmem:[%s269 + $0x10] sm:$0xff]
        %v281 = vld [vmem:[%s269 + $0x18] sm:$0xff]
        %v282 = vld [vmem:[%s1] sm:$0xff]
        %v283 = vld [vmem:[%s1 + $0x8] sm:$0xff]
        %v284 = vld [vmem:[%s1 + $0x10] sm:$0xff]
        %v285 = vld [vmem:[%s1 + $0x18] sm:$0xff]
        %v286 = vld [vmem:[%s3] sm:$0x1]
        %v288 = vlaneseq
        %v289 = vshrl.u32 %v288, 7
        %v290 = vsub.s32 0, %v289
        %v291 = vrot.slane %v286, %v290
        %vm293 = vcmask 261120
        %v295 = vsel %vm293, %v278, 0
        %v298 = vsel %vm293, %v279, 0
        %v301 = vsel %vm293, %v280, 0
        %v304 = vsel %vm293, %v281, 0
        %306 = vmatprep.subr.mxu0 0.0
        %307 = vmatpush1.msra.mxu0 %v282
        %308 = vmatprep.subr.mxu0 0.0
        %309 = vmatpush1.msra.mxu0 %v283
        %310 = vmatprep.subr.mxu0 0.0
        %311 = vmatpush1.msra.mxu0 %v284
        %312 = vmatprep.subr.mxu0 0.0
        %313 = vmatpush1.msra.mxu0 %v285
        %314 = vmatprep.subr.mxu0 0.0
        %315 = vmatpush1.msra.mxu0 0.0
        %316 = vmatprep.subr.mxu0 0.0
        %317 = vmatpush1.msra.mxu0 0.0
        %318 = vmatprep.subr.mxu0 0.0
        %319 = vmatpush1.msra.mxu0 0.0
        %320 = vmatprep.subr.mxu0 0.0
        %321 = vmatpush1.msra.mxu0 0.0
        %322 = vmatprep.subr.mxu0 0.0
        %323 = vmatpush1.msra.mxu0 0.0
        %324 = vmatprep.subr.mxu0 0.0
        %325 = vmatpush1.msra.mxu0 0.0
        %326 = vmatprep.subr.mxu0 0.0
        %327 = vmatpush1.msra.mxu0 0.0
        %328 = vmatprep.subr.mxu0 0.0
        %329 = vmatpush1.msra.mxu0 0.0
        %330 = vmatprep.subr.mxu0 0.0
        %331 = vmatpush1.msra.mxu0 0.0
        %332 = vmatprep.subr.mxu0 0.0
        %333 = vmatpush1.msra.mxu0 0.0
        %334 = vmatprep.subr.mxu0 0.0
        %335 = vmatpush1.msra.mxu0 0.0
        %336 = vmatprep.subr.mxu0 0.0
        %337 = vmatpush1.msra.mxu0 0.0
        %338 = vmatprep.subr.mxu0 0.0
        %339 = vmatpush1.msra.mxu0 0.0
        %340 = vmatprep.subr.mxu0 0.0
        %341 = vmatpush1.msra.mxu0 0.0
        %342 = vmatprep.subr.mxu0 0.0
        %343 = vmatpush1.msra.mxu0 0.0
        %344 = vmatprep.subr.mxu0 0.0
        %345 = vmatpush1.msra.mxu0 0.0
        %346 = vmatprep.subr.mxu0 0.0
        %347 = vmatpush1.msra.mxu0 0.0
        %348 = vmatprep.subr.mxu0 0.0
        %349 = vmatpush1.msra.mxu0 0.0
        %350 = vmatprep.subr.mxu0 0.0
        %351 = vmatpush1.msra.mxu0 0.0
        %352 = vmatprep.subr.mxu0 0.0
        %353 = vmatpush1.msra.mxu0 0.0
        %354 = vmatprep.subr.mxu0 0.0
        %355 = vmatpush1.msra.mxu0 0.0
        %356 = vmatprep.subr.mxu0 0.0
        %357 = vmatpush1.msra.mxu0 0.0
        %358 = vmatprep.subr.mxu0 0.0
        %359 = vmatpush1.msra.mxu0 0.0
        %360 = vmatprep.subr.mxu0 0.0
        %361 = vmatpush1.msra.mxu0 0.0
        %362 = vmatprep.subr.mxu0 0.0
        %363 = vmatpush1.msra.mxu0 0.0
        %364 = vmatprep.subr.mxu0 0.0
        %365 = vmatpush1.msra.mxu0 0.0
        %366 = vmatprep.subr.mxu0 0.0
        %367 = vmatpush1.msra.mxu0 0.0
        %368 = vmatprep.subr.mxu0 0.0
        %369 = vmatpush1.msra.mxu0 0.0
        %370 = vmatprep.mubr.f32.mxu0 0.0
        %371 = vmatmul.mubr.f32.gmra.mrb[0].mxu0 %v295
        %v372 = vpop.f32.mrb[0].mxu0
        %v373 = vadd.f32 %v291, %v372
        %v374 = vpop.f32.mrb[0].mxu0
        %375 = vmatprep.mubr.f32.mxu0 0.0
        %376 = vmatmul.mubr.f32.gmra.mrb[0].mxu0 %v298
        %v377 = vpop.f32.mrb[0].mxu0
        %v378 = vadd.f32 %v291, %v377
        %v379 = vpop.f32.mrb[0].mxu0
        %380 = vmatprep.mubr.f32.mxu0 0.0
        %381 = vmatmul.mubr.f32.gmra.mrb[0].mxu0 %v301
        %v382 = vpop.f32.mrb[0].mxu0
        %v383 = vadd.f32 %v291, %v382
        %v384 = vpop.f32.mrb[0].mxu0
        %385 = vmatprep.mubr.f32.mxu0 0.0
        %386 = vmatmul.mubr.f32.gmra.mrb[0].mxu0 %v304
        %v387 = vpop.f32.mrb[0].mxu0
        %v388 = vadd.f32 %v291, %v387
        %v389 = vpop.f32.mrb[0].mxu0
        %390 = vdwg.mxu0
        %391 = vst [vmem:[#allocation2] sm:$0xff] %v373
        %392 = vst [vmem:[#allocation2 + $0x8] sm:$0xff] %v378
        %393 = vst [vmem:[#allocation2 + $0x10] sm:$0xff] %v383
        %394 = vst [vmem:[#allocation2 + $0x18] sm:$0xff] %v388
        %v395 = vld [vmem:[%s2] sm:$0xff]
        %v396 = vld [vmem:[%s2 + $0x8] sm:$0xff]
        %v397 = vld [vmem:[%s2 + $0x10] sm:$0xff]
        %v398 = vld [vmem:[%s2 + $0x18] sm:$0xff]
        %v399 = vld [vmem:[#allocation3] sm:$0xff]
        %v400 = vld [vmem:[#allocation4] sm:$0xff]
        %v401 = vld [vmem:[#allocation2] sm:$0xff]
        %v403 = vsel %vm293, %v399, 0
        %405 = vmatprep.subr.mxu0 0.0
        %406 = vmatpush1.msra.mxu0 %v395
        %407 = vmatprep.subr.mxu0 0.0
        %408 = vmatpush1.msra.mxu0 %v396
        %409 = vmatprep.subr.mxu0 0.0
        %410 = vmatpush1.msra.mxu0 %v397
        %411 = vmatprep.subr.mxu0 0.0
        %412 = vmatpush1.msra.mxu0 %v398
        %413 = vmatprep.subr.mxu0 0.0
        %414 = vmatpush1.msra.mxu0 0.0
        %415 = vmatprep.subr.mxu0 0.0
        %416 = vmatpush1.msra.mxu0 0.0
        %417 = vmatprep.subr.mxu0 0.0
        %418 = vmatpush1.msra.mxu0 0.0
        %419 = vmatprep.subr.mxu0 0.0
        %420 = vmatpush1.msra.mxu0 0.0
        %421 = vmatprep.subr.mxu0 0.0
        %422 = vmatpush1.msra.mxu0 0.0
        %423 = vmatprep.subr.mxu0 0.0
        %424 = vmatpush1.msra.mxu0 0.0
        %425 = vmatprep.subr.mxu0 0.0
        %426 = vmatpush1.msra.mxu0 0.0
        %427 = vmatprep.subr.mxu0 0.0
        %428 = vmatpush1.msra.mxu0 0.0
        %429 = vmatprep.subr.mxu0 0.0
        %430 = vmatpush1.msra.mxu0 0.0
        %431 = vmatprep.subr.mxu0 0.0
        %432 = vmatpush1.msra.mxu0 0.0
        %433 = vmatprep.subr.mxu0 0.0
        %434 = vmatpush1.msra.mxu0 0.0
        %435 = vmatprep.subr.mxu0 0.0
        %436 = vmatpush1.msra.mxu0 0.0
        %437 = vmatprep.subr.mxu0 0.0
        %438 = vmatpush1.msra.mxu0 0.0
        %439 = vmatprep.subr.mxu0 0.0
        %440 = vmatpush1.msra.mxu0 0.0
        %441 = vmatprep.subr.mxu0 0.0
        %442 = vmatpush1.msra.mxu0 0.0
        %443 = vmatprep.subr.mxu0 0.0
        %444 = vmatpush1.msra.mxu0 0.0
        %445 = vmatprep.subr.mxu0 0.0
        %446 = vmatpush1.msra.mxu0 0.0
        %447 = vmatprep.subr.mxu0 0.0
        %448 = vmatpush1.msra.mxu0 0.0
        %449 = vmatprep.subr.mxu0 0.0
        %450 = vmatpush1.msra.mxu0 0.0
        %451 = vmatprep.subr.mxu0 0.0
        %452 = vmatpush1.msra.mxu0 0.0
        %453 = vmatprep.subr.mxu0 0.0
        %454 = vmatpush1.msra.mxu0 0.0
        %455 = vmatprep.subr.mxu0 0.0
        %456 = vmatpush1.msra.mxu0 0.0
        %457 = vmatprep.subr.mxu0 0.0
        %458 = vmatpush1.msra.mxu0 0.0
        %459 = vmatprep.subr.mxu0 0.0
        %460 = vmatpush1.msra.mxu0 0.0
        %461 = vmatprep.subr.mxu0 0.0
        %462 = vmatpush1.msra.mxu0 0.0
        %463 = vmatprep.subr.mxu0 0.0
        %464 = vmatpush1.msra.mxu0 0.0
        %465 = vmatprep.subr.mxu0 0.0
        %466 = vmatpush1.msra.mxu0 0.0
        %467 = vmatprep.subr.mxu0 0.0
        %468 = vmatpush1.msra.mxu0 0.0
        %469 = vmatprep.mubr.f32.mxu0 0.0
        %470 = vmatmul.mubr.f32.gmra.mrb[0].mxu0 %v403
        %v471 = vpop.f32.mrb[0].mxu0
        %v472 = vadd.f32 0.0, %v471
        %v473 = vpop.f32.mrb[0].mxu0
        %474 = vdwg.mxu0
        %v475 = vadd.f32 %v401, %v472
        %v476 = vxor.u32 %v475, 2147483648
        %v477 = vmul.f32 %v476, 1.442695
        %v478 = vpow.pop %v477
        %v479 = vadd.f32 %v478, 1.0
        %v480 = vrcp.pop %v479
        %v481 = vmul.f32 1.0, %v480
        %v482 = vtanh.pop %v475
        %484 = vrot.lane.b32.xlu0 %v400, 32
        %v485 = vpop.permute.xlu0 %484
        %v487 = vmul.f32 %v481, %v485
        %489 = vrot.lane.b32.xlu0 %v482, 64
        %v490 = vpop.permute.xlu0 %489
        %v492 = vmul.f32 %v481, %v490
        %494 = vrot.lane.b32.xlu0 %v492, 32
        %v495 = vpop.permute.xlu0 %494
        %v497 = vadd.f32 %v487, %v495
        %v498 = vtanh.pop %v497
        %500 = vrot.lane.b32.xlu0 %v498, 64
        %v501 = vpop.permute.xlu0 %500
        %v503 = vmul.f32 %v481, %v501
        %s504 = scalar_lea.vmem [#allocation2], 8
        %v505 = vld [vmem:[%s504] sm:$0xff]
        %507 = vrot.lane.b32.xlu0 %v503, 32
        %v508 = vpop.permute.xlu0 %507
        %v509 = vsel %vm293, %v508, 0
        %511 = vmatprep.subr.mxu0 0.0
        %512 = vmatpush1.msra.mxu0 %v395
        %513 = vmatprep.subr.mxu0 0.0
        %514 = vmatpush1.msra.mxu0 %v396
        %515 = vmatprep.subr.mxu0 0.0
        %516 = vmatpush1.msra.mxu0 %v397
        %517 = vmatprep.subr.mxu0 0.0
        %518 = vmatpush1.msra.mxu0 %v398
        %519 = vmatprep.subr.mxu0 0.0
        %520 = vmatpush1.msra.mxu0 0.0
        %521 = vmatprep.subr.mxu0 0.0
        %522 = vmatpush1.msra.mxu0 0.0
        %523 = vmatprep.subr.mxu0 0.0
        %524 = vmatpush1.msra.mxu0 0.0
        %525 = vmatprep.subr.mxu0 0.0
        %526 = vmatpush1.msra.mxu0 0.0
        %527 = vmatprep.subr.mxu0 0.0
        %528 = vmatpush1.msra.mxu0 0.0
        %529 = vmatprep.subr.mxu0 0.0
        %530 = vmatpush1.msra.mxu0 0.0
        %531 = vmatprep.subr.mxu0 0.0
        %532 = vmatpush1.msra.mxu0 0.0
        %533 = vmatprep.subr.mxu0 0.0
        %534 = vmatpush1.msra.mxu0 0.0
        %535 = vmatprep.subr.mxu0 0.0
        %536 = vmatpush1.msra.mxu0 0.0
        %537 = vmatprep.subr.mxu0 0.0
        %538 = vmatpush1.msra.mxu0 0.0
        %539 = vmatprep.subr.mxu0 0.0
        %540 = vmatpush1.msra.mxu0 0.0
        %541 = vmatprep.subr.mxu0 0.0
        %542 = vmatpush1.msra.mxu0 0.0
        %543 = vmatprep.subr.mxu0 0.0
        %544 = vmatpush1.msra.mxu0 0.0
        %545 = vmatprep.subr.mxu0 0.0
        %546 = vmatpush1.msra.mxu0 0.0
        %547 = vmatprep.subr.mxu0 0.0
        %548 = vmatpush1.msra.mxu0 0.0
        %549 = vmatprep.subr.mxu0 0.0
        %550 = vmatpush1.msra.mxu0 0.0
        %551 = vmatprep.subr.mxu0 0.0
        %552 = vmatpush1.msra.mxu0 0.0
        %553 = vmatprep.subr.mxu0 0.0
        %554 = vmatpush1.msra.mxu0 0.0
        %555 = vmatprep.subr.mxu0 0.0
        %556 = vmatpush1.msra.mxu0 0.0
        %557 = vmatprep.subr.mxu0 0.0
        %558 = vmatpush1.msra.mxu0 0.0
        %559 = vmatprep.subr.mxu0 0.0
        %560 = vmatpush1.msra.mxu0 0.0
        %561 = vmatprep.subr.mxu0 0.0
        %562 = vmatpush1.msra.mxu0 0.0
        %563 = vmatprep.subr.mxu0 0.0
        %564 = vmatpush1.msra.mxu0 0.0
        %565 = vmatprep.subr.mxu0 0.0
        %566 = vmatpush1.msra.mxu0 0.0
        %567 = vmatprep.subr.mxu0 0.0
        %568 = vmatpush1.msra.mxu0 0.0
        %569 = vmatprep.subr.mxu0 0.0
        %570 = vmatpush1.msra.mxu0 0.0
        %571 = vmatprep.subr.mxu0 0.0
        %572 = vmatpush1.msra.mxu0 0.0
        %573 = vmatprep.subr.mxu0 0.0
        %574 = vmatpush1.msra.mxu0 0.0
        %575 = vmatprep.mubr.f32.mxu0 0.0
        %576 = vmatmul.mubr.f32.gmra.mrb[0].mxu0 %v509
        %v577 = vpop.f32.mrb[0].mxu0
        %v578 = vadd.f32 0.0, %v577
        %v579 = vpop.f32.mrb[0].mxu0
        %580 = vdwg.mxu0
        %v581 = vadd.f32 %v505, %v578
        %v582 = vxor.u32 %v581, 2147483648
        %v583 = vmul.f32 %v582, 1.442695
        %v584 = vpow.pop %v583
        %v585 = vadd.f32 %v584, 1.0
        %v586 = vrcp.pop %v585
        %v587 = vmul.f32 1.0, %v586
        %v588 = vtanh.pop %v581
        %v589 = vmul.f32 %v587, %v497
        %591 = vrot.lane.b32.xlu0 %v588, 64
        %v592 = vpop.permute.xlu0 %591
        %v594 = vmul.f32 %v587, %v592
        %596 = vrot.lane.b32.xlu0 %v594, 32
        %v597 = vpop.permute.xlu0 %596
        %v599 = vadd.f32 %v589, %v597
        %v600 = vtanh.pop %v599
        %602 = vrot.lane.b32.xlu0 %v600, 64
        %v603 = vpop.permute.xlu0 %602
        %v605 = vmul.f32 %v587, %v603
        %s606 = scalar_lea.vmem [#allocation2], 16
        %v607 = vld [vmem:[%s606] sm:$0xff]
        %609 = vrot.lane.b32.xlu0 %v605, 32
        %v610 = vpop.permute.xlu0 %609
        %v611 = vsel %vm293, %v610, 0
        %613 = vmatprep.subr.mxu0 0.0
        %614 = vmatpush1.msra.mxu0 %v395
        %615 = vmatprep.subr.mxu0 0.0
        %616 = vmatpush1.msra.mxu0 %v396
        %617 = vmatprep.subr.mxu0 0.0
        %618 = vmatpush1.msra.mxu0 %v397
        %619 = vmatprep.subr.mxu0 0.0
        %620 = vmatpush1.msra.mxu0 %v398
        %621 = vmatprep.subr.mxu0 0.0
        %622 = vmatpush1.msra.mxu0 0.0
        %623 = vmatprep.subr.mxu0 0.0
        %624 = vmatpush1.msra.mxu0 0.0
        %625 = vmatprep.subr.mxu0 0.0
        %626 = vmatpush1.msra.mxu0 0.0
        %627 = vmatprep.subr.mxu0 0.0
        %628 = vmatpush1.msra.mxu0 0.0
        %629 = vmatprep.subr.mxu0 0.0
        %630 = vmatpush1.msra.mxu0 0.0
        %631 = vmatprep.subr.mxu0 0.0
        %632 = vmatpush1.msra.mxu0 0.0
        %633 = vmatprep.subr.mxu0 0.0
        %634 = vmatpush1.msra.mxu0 0.0
        %635 = vmatprep.subr.mxu0 0.0
        %636 = vmatpush1.msra.mxu0 0.0
        %637 = vmatprep.subr.mxu0 0.0
        %638 = vmatpush1.msra.mxu0 0.0
        %639 = vmatprep.subr.mxu0 0.0
        %640 = vmatpush1.msra.mxu0 0.0
        %641 = vmatprep.subr.mxu0 0.0
        %642 = vmatpush1.msra.mxu0 0.0
        %643 = vmatprep.subr.mxu0 0.0
        %644 = vmatpush1.msra.mxu0 0.0
        %645 = vmatprep.subr.mxu0 0.0
        %646 = vmatpush1.msra.mxu0 0.0
        %647 = vmatprep.subr.mxu0 0.0
        %648 = vmatpush1.msra.mxu0 0.0
        %649 = vmatprep.subr.mxu0 0.0
        %650 = vmatpush1.msra.mxu0 0.0
        %651 = vmatprep.subr.mxu0 0.0
        %652 = vmatpush1.msra.mxu0 0.0
        %653 = vmatprep.subr.mxu0 0.0
        %654 = vmatpush1.msra.mxu0 0.0
        %655 = vmatprep.subr.mxu0 0.0
        %656 = vmatpush1.msra.mxu0 0.0
        %657 = vmatprep.subr.mxu0 0.0
        %658 = vmatpush1.msra.mxu0 0.0
        %659 = vmatprep.subr.mxu0 0.0
        %660 = vmatpush1.msra.mxu0 0.0
        %661 = vmatprep.subr.mxu0 0.0
        %662 = vmatpush1.msra.mxu0 0.0
        %663 = vmatprep.subr.mxu0 0.0
        %664 = vmatpush1.msra.mxu0 0.0
        %665 = vmatprep.subr.mxu0 0.0
        %666 = vmatpush1.msra.mxu0 0.0
        %667 = vmatprep.subr.mxu0 0.0
        %668 = vmatpush1.msra.mxu0 0.0
        %669 = vmatprep.subr.mxu0 0.0
        %670 = vmatpush1.msra.mxu0 0.0
        %671 = vmatprep.subr.mxu0 0.0
        %672 = vmatpush1.msra.mxu0 0.0
        %673 = vmatprep.subr.mxu0 0.0
        %674 = vmatpush1.msra.mxu0 0.0
        %675 = vmatprep.subr.mxu0 0.0
        %676 = vmatpush1.msra.mxu0 0.0
        %677 = vmatprep.mubr.f32.mxu0 0.0
        %678 = vmatmul.mubr.f32.gmra.mrb[0].mxu0 %v611
        %v679 = vpop.f32.mrb[0].mxu0
        %v680 = vadd.f32 0.0, %v679
        %v681 = vpop.f32.mrb[0].mxu0
        %682 = vdwg.mxu0
        %v683 = vadd.f32 %v607, %v680
        %v684 = vxor.u32 %v683, 2147483648
        %v685 = vmul.f32 %v684, 1.442695
        %v686 = vpow.pop %v685
        %v687 = vadd.f32 %v686, 1.0
        %v688 = vrcp.pop %v687
        %v689 = vmul.f32 1.0, %v688
        %v690 = vtanh.pop %v683
        %v691 = vmul.f32 %v689, %v599
        %693 = vrot.lane.b32.xlu0 %v690, 64
        %v694 = vpop.permute.xlu0 %693
        %v696 = vmul.f32 %v689, %v694
        %698 = vrot.lane.b32.xlu0 %v696, 32
        %v699 = vpop.permute.xlu0 %698
        %v701 = vadd.f32 %v691, %v699
        %v702 = vtanh.pop %v701
        %704 = vrot.lane.b32.xlu0 %v702, 64
        %v705 = vpop.permute.xlu0 %704
        %v707 = vmul.f32 %v689, %v705
        %s708 = scalar_lea.vmem [#allocation2], 24
        %v709 = vld [vmem:[%s708] sm:$0xff]
        %711 = vrot.lane.b32.xlu0 %v707, 32
        %v712 = vpop.permute.xlu0 %711
        %v713 = vsel %vm293, %v712, 0
        %715 = vmatprep.subr.mxu0 0.0
        %716 = vmatpush1.msra.mxu0 %v395
        %717 = vmatprep.subr.mxu0 0.0
        %718 = vmatpush1.msra.mxu0 %v396
        %719 = vmatprep.subr.mxu0 0.0
        %720 = vmatpush1.msra.mxu0 %v397
        %721 = vmatprep.subr.mxu0 0.0
        %722 = vmatpush1.msra.mxu0 %v398
        %723 = vmatprep.subr.mxu0 0.0
        %724 = vmatpush1.msra.mxu0 0.0
        %725 = vmatprep.subr.mxu0 0.0
        %726 = vmatpush1.msra.mxu0 0.0
        %727 = vmatprep.subr.mxu0 0.0
        %728 = vmatpush1.msra.mxu0 0.0
        %729 = vmatprep.subr.mxu0 0.0
        %730 = vmatpush1.msra.mxu0 0.0
        %731 = vmatprep.subr.mxu0 0.0
        %732 = vmatpush1.msra.mxu0 0.0
        %733 = vmatprep.subr.mxu0 0.0
        %734 = vmatpush1.msra.mxu0 0.0
        %735 = vmatprep.subr.mxu0 0.0
        %736 = vmatpush1.msra.mxu0 0.0
        %737 = vmatprep.subr.mxu0 0.0
        %738 = vmatpush1.msra.mxu0 0.0
        %739 = vmatprep.subr.mxu0 0.0
        %740 = vmatpush1.msra.mxu0 0.0
        %741 = vmatprep.subr.mxu0 0.0
        %742 = vmatpush1.msra.mxu0 0.0
        %743 = vmatprep.subr.mxu0 0.0
        %744 = vmatpush1.msra.mxu0 0.0
        %745 = vmatprep.subr.mxu0 0.0
        %746 = vmatpush1.msra.mxu0 0.0
        %747 = vmatprep.subr.mxu0 0.0
        %748 = vmatpush1.msra.mxu0 0.0
        %749 = vmatprep.subr.mxu0 0.0
        %750 = vmatpush1.msra.mxu0 0.0
        %751 = vmatprep.subr.mxu0 0.0
        %752 = vmatpush1.msra.mxu0 0.0
        %753 = vmatprep.subr.mxu0 0.0
        %754 = vmatpush1.msra.mxu0 0.0
        %755 = vmatprep.subr.mxu0 0.0
        %756 = vmatpush1.msra.mxu0 0.0
        %757 = vmatprep.subr.mxu0 0.0
        %758 = vmatpush1.msra.mxu0 0.0
        %759 = vmatprep.subr.mxu0 0.0
        %760 = vmatpush1.msra.mxu0 0.0
        %761 = vmatprep.subr.mxu0 0.0
        %762 = vmatpush1.msra.mxu0 0.0
        %763 = vmatprep.subr.mxu0 0.0
        %764 = vmatpush1.msra.mxu0 0.0
        %765 = vmatprep.subr.mxu0 0.0
        %766 = vmatpush1.msra.mxu0 0.0
        %767 = vmatprep.subr.mxu0 0.0
        %768 = vmatpush1.msra.mxu0 0.0
        %769 = vmatprep.subr.mxu0 0.0
        %770 = vmatpush1.msra.mxu0 0.0
        %771 = vmatprep.subr.mxu0 0.0
        %772 = vmatpush1.msra.mxu0 0.0
        %773 = vmatprep.subr.mxu0 0.0
        %774 = vmatpush1.msra.mxu0 0.0
        %775 = vmatprep.subr.mxu0 0.0
        %776 = vmatpush1.msra.mxu0 0.0
        %777 = vmatprep.subr.mxu0 0.0
        %778 = vmatpush1.msra.mxu0 0.0
        %779 = vmatprep.mubr.f32.mxu0 0.0
        %780 = vmatmul.mubr.f32.gmra.mrb[0].mxu0 %v713
        %v781 = vpop.f32.mrb[0].mxu0
        %v782 = vadd.f32 0.0, %v781
        %v783 = vpop.f32.mrb[0].mxu0
        %784 = vdwg.mxu0
        %v785 = vadd.f32 %v709, %v782
        %v786 = vxor.u32 %v785, 2147483648
        %v787 = vmul.f32 %v786, 1.442695
        %v788 = vpow.pop %v787
        %v789 = vadd.f32 %v788, 1.0
        %v790 = vrcp.pop %v789
        %v791 = vmul.f32 1.0, %v790
        %v792 = vtanh.pop %v785
        %v793 = vmul.f32 %v791, %v701
        %795 = vrot.lane.b32.xlu0 %v792, 64
        %v796 = vpop.permute.xlu0 %795
        %v798 = vmul.f32 %v791, %v796
        %800 = vrot.lane.b32.xlu0 %v798, 32
        %v801 = vpop.permute.xlu0 %800
        %v803 = vadd.f32 %v793, %v801
        %v804 = vtanh.pop %v803
        %806 = vrot.lane.b32.xlu0 %v804, 64
        %v807 = vpop.permute.xlu0 %806
        %v809 = vmul.f32 %v791, %v807
        %811 = vrot.lane.b32.xlu0 %v809, 32
        %v812 = vpop.permute.xlu0 %811
        %814 = vst.msk [vmem:[#allocation3] sm:$0xff] %vm293, %v812
        %816 = vrot.lane.b32.xlu0 %v803, 96
        %v817 = vpop.permute.xlu0 %816
        %819 = vst.msk [vmem:[#allocation4] sm:$0xff] %vm293, %v817
        %p820 = scmp.eq.s32.totalorder %s23, 1
        // Predicated region
        $region49: #{tpu_custom_call.1} parent=43 // pred_check
          %p821 = pneg %p820
        $region50: #{tpu_custom_call.1} parent=43 // pred_check_branch
          %823 = sbr.rel (%p821) target = $region52
        $region51: #{tpu_custom_call.1} parent=43 // pred_region
          %v824 = vld [vmem:[%s4] sm:$0xff]
          %v825 = vld [vmem:[%s4 + $0x8] sm:$0xff]
          %v826 = vld [vmem:[%s4 + $0x10] sm:$0xff]
          %v827 = vld [vmem:[%s4 + $0x18] sm:$0xff]
          %v828 = vld [vmem:[%s5] sm:$0x1]
          %v830 = vlaneseq
          %v831 = vshrl.u32 %v830, 7
          %v832 = vsub.s32 0, %v831
          %v833 = vrot.slane %v828, %v832
          %v835 = vsel %vm293, %v812, 0
          %837 = vmatprep.subr.mxu0 0.0
          %838 = vmatpush1.msra.mxu0 %v824
          %839 = vmatprep.subr.mxu0 0.0
          %840 = vmatpush1.msra.mxu0 %v825
          %841 = vmatprep.subr.mxu0 0.0
          %842 = vmatpush1.msra.mxu0 %v826
          %843 = vmatprep.subr.mxu0 0.0
          %844 = vmatpush1.msra.mxu0 %v827
          %845 = vmatprep.subr.mxu0 0.0
          %846 = vmatpush1.msra.mxu0 0.0
          %847 = vmatprep.subr.mxu0 0.0
          %848 = vmatpush1.msra.mxu0 0.0
          %849 = vmatprep.subr.mxu0 0.0
          %850 = vmatpush1.msra.mxu0 0.0
          %851 = vmatprep.subr.mxu0 0.0
          %852 = vmatpush1.msra.mxu0 0.0
          %853 = vmatprep.subr.mxu0 0.0
          %854 = vmatpush1.msra.mxu0 0.0
          %855 = vmatprep.subr.mxu0 0.0
          %856 = vmatpush1.msra.mxu0 0.0
          %857 = vmatprep.subr.mxu0 0.0
          %858 = vmatpush1.msra.mxu0 0.0
          %859 = vmatprep.subr.mxu0 0.0
          %860 = vmatpush1.msra.mxu0 0.0
          %861 = vmatprep.subr.mxu0 0.0
          %862 = vmatpush1.msra.mxu0 0.0
          %863 = vmatprep.subr.mxu0 0.0
          %864 = vmatpush1.msra.mxu0 0.0
          %865 = vmatprep.subr.mxu0 0.0
          %866 = vmatpush1.msra.mxu0 0.0
          %867 = vmatprep.subr.mxu0 0.0
          %868 = vmatpush1.msra.mxu0 0.0
          %869 = vmatprep.subr.mxu0 0.0
          %870 = vmatpush1.msra.mxu0 0.0
          %871 = vmatprep.subr.mxu0 0.0
          %872 = vmatpush1.msra.mxu0 0.0
          %873 = vmatprep.subr.mxu0 0.0
          %874 = vmatpush1.msra.mxu0 0.0
          %875 = vmatprep.subr.mxu0 0.0
          %876 = vmatpush1.msra.mxu0 0.0
          %877 = vmatprep.subr.mxu0 0.0
          %878 = vmatpush1.msra.mxu0 0.0
          %879 = vmatprep.subr.mxu0 0.0
          %880 = vmatpush1.msra.mxu0 0.0
          %881 = vmatprep.subr.mxu0 0.0
          %882 = vmatpush1.msra.mxu0 0.0
          %883 = vmatprep.subr.mxu0 0.0
          %884 = vmatpush1.msra.mxu0 0.0
          %885 = vmatprep.subr.mxu0 0.0
          %886 = vmatpush1.msra.mxu0 0.0
          %887 = vmatprep.subr.mxu0 0.0
          %888 = vmatpush1.msra.mxu0 0.0
          %889 = vmatprep.subr.mxu0 0.0
          %890 = vmatpush1.msra.mxu0 0.0
          %891 = vmatprep.subr.mxu0 0.0
          %892 = vmatpush1.msra.mxu0 0.0
          %893 = vmatprep.subr.mxu0 0.0
          %894 = vmatpush1.msra.mxu0 0.0
          %895 = vmatprep.subr.mxu0 0.0
          %896 = vmatpush1.msra.mxu0 0.0
          %897 = vmatprep.subr.mxu0 0.0
          %898 = vmatpush1.msra.mxu0 0.0
          %899 = vmatprep.subr.mxu0 0.0
          %900 = vmatpush1.msra.mxu0 0.0
          %901 = vmatprep.mubr.f32.mxu0 0.0
          %902 = vmatmul.mubr.f32.gmra.mrb[0].mxu0 %v835
          %v903 = vpop.f32.mrb[0].mxu0
          %v904 = vadd.f32 %v833, %v903
          %v905 = vpop.f32.mrb[0].mxu0
          %906 = vdwg.mxu0
          %vm907 = vcmask 64512
          %908 = vst.msk [vmem:[#allocation5] sm:$0xff] %vm907, %v904
        $region52: #{tpu_custom_call.1} parent=43 // pred_fallthru
          _
        // Predicated region
        $region53: #{tpu_custom_call.1} parent=43 // pred_check
          %p909 = pneg %p181
        $region54: #{tpu_custom_call.1} parent=43 // pred_check_branch
          %911 = sbr.rel (%p909) target = $region56
        $region55: #{tpu_custom_call.1} parent=43 // pred_region
          %s913 = ssub.s32 128, 128
          %914 = vsyncadd [#allocation6], %s913
          %s915 = smul.addr %s22, 128
          %s916 = scalar_lea.hbm %s6, %s915
          %s918 = sshll.u32 [#allocation5], 4
          %s919 = int_to_ptr.vmem [resolvable:$true] %s918
          %921 = dma.vmem_to_hbm [thread:$0]  %s919, 128, %s916, [#allocation6]
        $region56: #{tpu_custom_call.1} parent=43 // pred_fallthru
          _
        // Predicated region
        $region57: #{tpu_custom_call.1} parent=43 // pred_check
          %p922 = pneg %p181
        $region58: #{tpu_custom_call.1} parent=43 // pred_check_branch
          %924 = sbr.rel (%p922) target = $region60
        $region59: #{tpu_custom_call.1} parent=43 // pred_region
          %925 = dma.done [#allocation6], 128
        $region60: #{tpu_custom_call.1} parent=43 // pred_fallthru
          _
      $region44: #{tpu_custom_call.1} parent=5 // pred_fallthru
        _
      %p926 = scmp.le.s32.totalorder 2, %s13
      // Predicated region
      $region61: #{tpu_custom_call.1} parent=5 // pred_check
        %p927 = pneg %p926
      $region62: #{tpu_custom_call.1} parent=5 // pred_check_branch
        %929 = sbr.rel (%p927) target = $region64
      $region63: #{tpu_custom_call.1} parent=5 // pred_region
        %s930 = ssub.s32 %s13, 2
      $region64: #{tpu_custom_call.1} parent=5 // pred_fallthru
        _
    $region6: #{tpu_custom_call.1} parent=1 // loop_footer
      %s17 = sadd.s32 1, %s13
    $region7: #{tpu_custom_call.1} parent=1 // loop_footer_branch
      %12 = sbr.rel target = $region3
    $region8: #{tpu_custom_call.1} parent=1 // loop_exit
      _
    %931 = vsyncpa [#allocation6], 1
    %s932 = scalar_lea.sflag [#allocation6], 1
    %933 = vsyncpa %s932, 1

</llo_original>
